<compile_context>
chip_gen: v7x
topology: tpu7x:2x2x1
jax: 0.10.0
libtpu: 0.0.40
codegen_flags: <defaults>
</compile_context>

<pallas_src>
import functools

import jax
import jax.numpy as jnp
from jax.experimental import pallas as pl
from jax.experimental.pallas import tpu as pltpu

_LANE = 128


def _round_up(x, m):
    return ((x + m - 1) // m) * m


def _conv1x1_kernel(w_ref, x_ref, z_ref, *, bn):
    """w_ref: (C, C) f32 VMEM (resident); x_ref / z_ref: (bn, C, TP) blocks."""
    w = w_ref[...]                                    # (C, C) float32
    for b in range(bn):                               # bn is small & static -> unrolled
        xb = x_ref[b].astype(jnp.float32)             # (C, TP); upcast in-kernel only
        zb = jnp.dot(w, xb, preferred_element_type=jnp.float32)
        z_ref[b] = zb.astype(z_ref.dtype)             # write back in I/O dtype


def _plan_tiling(n, c, p, itemsize, *, target_block_bytes=2 << 20,
                 min_block_bytes=1 << 20, min_blocks=8, max_batch_fold=32):
    """Pick (bn, tp, num_pt, p_pad): lane-dense, byte-targeted blocks with a grid
    that keeps several independent steps for dual-TC / megacore balance."""
    p128 = _round_up(p, _LANE)                        # lane-dense pixel extent
    col_bytes = c * itemsize                          # bytes of one pixel column
    target_px = max(_LANE, (target_block_bytes // col_bytes) // _LANE * _LANE)

    if p128 > target_px:
        # Tile the pixel axis of a single image.
        bn, num_pt = 1, int(pl.cdiv(p128, target_px))
    else:
        # Whole (padded) image is below target: fold batch entries per block.
        num_pt = 1
        bn = max(1, min(n, max_batch_fold, target_px // p128))
        while n % bn:                                 # keep the batch grid exact
            bn -= 1

    # Keep enough grid steps for megacore / v7x dual-TC load balancing, as long
    # as each block stays >= min_block_bytes (~85% of HBM roofline at ~1 MiB).
    while (n // bn) * num_pt < min_blocks:
        if bn > 1:
            cand = bn // 2
            while n % cand:
                cand -= 1
            if cand * p128 * col_bytes < min_block_bytes:
                break
            bn = cand
        else:
            cand_tp = _round_up(int(pl.cdiv(p128, num_pt * 2)), _LANE)
            if cand_tp * col_bytes < min_block_bytes:
                break
            num_pt *= 2

    # Rebalance tp across the pixel tiles to minimize wrapper-side padding.
    tp = _round_up(int(pl.cdiv(p128, num_pt)), _LANE)
    p_pad = num_pt * tp
    return bn, tp, num_pt, p_pad


def invertible_conv1x1(x, weight, logdet=None, reverse=False, *,
                       target_block_bytes=2 << 20):
    """Forward of InvertibleConv1x1 (LU_decomposed=False).

    x: (N, C, H, W), weight: (C, C).  Returns (z, logdet) with z.dtype == x.dtype.
    """
    N, C, H, W = x.shape
    P = H * W
    itemsize = jnp.dtype(x.dtype).itemsize

    # Tiny CxC linear algebra (slogdet / inverse) is plain-JAX glue, not kernel work.
    w = weight.astype(jnp.float32)
    dlogdet = jnp.linalg.slogdet(w)[1] * (H * W)
    if reverse:
        w = jnp.linalg.inv(w)

    bn, tp, num_pt, p_pad = _plan_tiling(
        N, C, P, itemsize, target_block_bytes=target_block_bytes)

    x3 = x.reshape(N, C, P)                           # free reshape, no transpose
    if p_pad != P:                                    # lane-dense pad, sliced off below
        x3 = jnp.pad(x3, ((0, 0), (0, 0), (0, p_pad - P)))

    grid = (N // bn, num_pt)

    # VMEM budget: 2x double-buffered (input + output) blocks in I/O dtype plus
    # ~3 f32-sized in-kernel temporaries (upcast + matmul result), plus headroom.
    io_block = bn * C * tp * itemsize
    f32_block = bn * C * tp * 4
    vmem_limit = 4 * io_block + 3 * f32_block + (4 << 20)
    vmem_limit = int(min(max(vmem_limit, 16 << 20), 56 << 20))   # v7x-safe clamp

    kernel = functools.partial(_conv1x1_kernel, bn=bn)

    z3 = pl.pallas_call(
        kernel,
        out_shape=jax.ShapeDtypeStruct((N, C, p_pad), x.dtype),
        grid=grid,
        in_specs=[
            pl.BlockSpec((C, C), lambda b, p: (0, 0)),            # weight (resident)
            pl.BlockSpec((bn, C, tp), lambda b, p: (b, 0, p)),    # x block
        ],
        out_specs=pl.BlockSpec((bn, C, tp), lambda b, p: (b, 0, p)),
        compiler_params=pltpu.CompilerParams(
            dimension_semantics=("parallel", "parallel"),
            vmem_limit_bytes=vmem_limit),
    )(w, x3)

    z = z3[:, :, :P].reshape(N, C, H, W)
    if logdet is not None:
        logdet = logdet - dlogdet if reverse else logdet + dlogdet
    return z, logdet


def invertible_conv1x1_ref(x, weight, logdet=None, reverse=False):
    """Plain-JAX reference matching the PyTorch forward semantics."""
    N, C, H, W = x.shape
    dlogdet = jnp.linalg.slogdet(weight)[1] * (H * W)
    w = jnp.linalg.inv(weight) if reverse else weight
    z = jnp.einsum('oi,nihw->nohw', w, x.astype(jnp.float32))
    if logdet is not None:
        logdet = logdet - dlogdet if reverse else logdet + dlogdet
    return z, logdet


if __name__ == "__main__":
    key = jax.random.PRNGKey(0)
    kx, kw = jax.random.split(key)

    N, C, H, W = 2, 4, 16, 16
    x = jax.random.normal(kx, (N, C, H, W), dtype=jnp.float32)
    logdet0 = jnp.float32(0.0)

    # InvertibleConv1x1.__init__ (LU_decomposed=False): weight = QR(randn(C,C))[0]
    w_init = jnp.linalg.qr(jax.random.normal(kw, (C, C), dtype=jnp.float32))[0]

    # forward
    z, logdet = invertible_conv1x1(x, w_init, logdet0)
    z = jax.block_until_ready(z)
    logdet = jax.block_until_ready(logdet)
    z_ref, logdet_ref = invertible_conv1x1_ref(x, w_init, logdet0)
    assert jnp.allclose(z, z_ref, atol=1e-4, rtol=1e-4), "z mismatch"
    assert jnp.allclose(logdet, logdet_ref, atol=1e-4, rtol=1e-4), "logdet mismatch"

    # reverse path (weight inverse): should round-trip back to x and logdet0
    zr, logdet_r = invertible_conv1x1(z, w_init, logdet, reverse=True)
    zr = jax.block_until_ready(zr)
    logdet_r = jax.block_until_ready(logdet_r)
    assert jnp.allclose(zr, x, atol=1e-3, rtol=1e-3), "reverse z mismatch"
    assert jnp.allclose(logdet_r, logdet0, atol=1e-3), "reverse logdet mismatch"

    # bf16 I/O smoke test (dtype-polymorphic path; f32 accumulate in-kernel)
    xb = x.astype(jnp.bfloat16)
    zb, _ = invertible_conv1x1(xb, w_init, None)
    zb = jax.block_until_ready(zb)
    assert zb.dtype == jnp.bfloat16, "output dtype should follow input dtype"
    zb_ref, _ = invertible_conv1x1_ref(xb, w_init, None)
    assert jnp.allclose(zb.astype(jnp.float32), zb_ref, atol=3e-2, rtol=3e-2), \
        "bf16 z mismatch"

    print("KERNEL_OK")
</pallas_src>

<mosaic_0001>
module attributes {stable_mosaic.version = 11 : i64} {
  func.func @_conv1x1_kernel(%arg0: i32, %arg1: i32, %arg2: memref<4x4xf32, #tpu.memory_space<vmem>>, %arg3: memref<2x4x256xf32, #tpu.memory_space<vmem>>, %arg4: memref<2x4x256xf32, #tpu.memory_space<vmem>>) attributes {dimension_semantics = [#tpu.dimension_semantics<parallel>, #tpu.dimension_semantics<parallel>], iteration_bounds = array<i64: 1, 1>, scalar_prefetch = 0 : i64, scratch_operands = 0 : i64, tpu.core_type = #tpu.core_type<tc>, window_params = [{pipeline_mode = #tpu.pipeline_mode<synchronous>, transform_indices = @transform_0, window_bounds = array<i64: 4, 4>}, {transform_indices = @transform_1, window_bounds = array<i64: 2, 4, 256>}, {transform_indices = @transform_2, window_bounds = array<i64: 2, 4, 256>}]} {
    %c0 = arith.constant 0 : index
    %c0_0 = arith.constant 0 : index
    %0 = vector.load %arg2[%c0, %c0_0] : memref<4x4xf32, #tpu.memory_space<vmem>>, vector<4x4xf32>
    %c0_1 = arith.constant 0 : index
    %c0_2 = arith.constant 0 : index
    %c0_3 = arith.constant 0 : index
    %1 = vector.load %arg3[%c0_1, %c0_2, %c0_3] : memref<2x4x256xf32, #tpu.memory_space<vmem>>, vector<1x4x256xf32>
    %2 = vector.shape_cast %1 : vector<1x4x256xf32> to vector<4x256xf32>
    %cst = arith.constant dense<0.000000e+00> : vector<4x256xf32>
    %3 = tpu.matmul %0, %2, %cst {dimension_numbers = #tpu.dot_dimension_numbers<[1], [0], [0], [1], [0, 0, 1, 1], [], []>} : vector<4x4xf32>, vector<4x256xf32>, vector<4x256xf32> -> vector<4x256xf32>
    %c0_4 = arith.constant 0 : index
    %c0_5 = arith.constant 0 : index
    %c0_6 = arith.constant 0 : index
    %4 = vector.load %arg4[%c0_4, %c0_5, %c0_6] : memref<2x4x256xf32, #tpu.memory_space<vmem>>, vector<1x4x256xf32>
    %5 = vector.shape_cast %4 : vector<1x4x256xf32> to vector<4x256xf32>
    %6 = vector.shape_cast %3 : vector<4x256xf32> to vector<1x4x256xf32>
    tpu.vector_store %arg4[%c0_4, %c0_5, %c0_6], %6 {strides = array<i32>} : memref<2x4x256xf32, #tpu.memory_space<vmem>>, vector<1x4x256xf32>,
    %c1 = arith.constant 1 : index
    %c0_7 = arith.constant 0 : index
    %c0_8 = arith.constant 0 : index
    %7 = vector.load %arg3[%c1, %c0_7, %c0_8] : memref<2x4x256xf32, #tpu.memory_space<vmem>>, vector<1x4x256xf32>
    %8 = vector.shape_cast %7 : vector<1x4x256xf32> to vector<4x256xf32>
    %cst_9 = arith.constant dense<0.000000e+00> : vector<4x256xf32>
    %9 = tpu.matmul %0, %8, %cst_9 {dimension_numbers = #tpu.dot_dimension_numbers<[1], [0], [0], [1], [0, 0, 1, 1], [], []>} : vector<4x4xf32>, vector<4x256xf32>, vector<4x256xf32> -> vector<4x256xf32>
    %c1_10 = arith.constant 1 : index
    %c0_11 = arith.constant 0 : index
    %c0_12 = arith.constant 0 : index
    %10 = vector.load %arg4[%c1_10, %c0_11, %c0_12] : memref<2x4x256xf32, #tpu.memory_space<vmem>>, vector<1x4x256xf32>
    %11 = vector.shape_cast %10 : vector<1x4x256xf32> to vector<4x256xf32>
    %12 = vector.shape_cast %9 : vector<4x256xf32> to vector<1x4x256xf32>
    tpu.vector_store %arg4[%c1_10, %c0_11, %c0_12], %12 {strides = array<i32>} : memref<2x4x256xf32, #tpu.memory_space<vmem>>, vector<1x4x256xf32>,
    return
  }
  func.func @transform_0(%arg0: i32, %arg1: i32) -> (i32, i32) {
    %c0_i32 = arith.constant 0 : i32
    %c0_i32_0 = arith.constant 0 : i32
    %c0_i32_1 = arith.constant 0 : i32
    return %c0_i32, %c0_i32_0 : i32, i32
  }
  func.func @transform_1(%arg0: i32, %arg1: i32) -> (i32, i32, i32) {
    %c0_i32 = arith.constant 0 : i32
    %c0_i32_0 = arith.constant 0 : i32
    return %arg0, %c0_i32, %arg1 : i32, i32, i32
  }
  func.func @transform_2(%arg0: i32, %arg1: i32) -> (i32, i32, i32) {
    %c0_i32 = arith.constant 0 : i32
    %c0_i32_0 = arith.constant 0 : i32
    return %arg0, %c0_i32, %arg1 : i32, i32, i32
  }
}

</mosaic_0001>

<llo_original>
// kernel: tpu_custom_call.1
$region0: #{tpu_custom_call.1}
  #allocation0 [shape = 'u32[]', space=smem, size = 0x4, offset = 0x4, fixed_abs, tag = 'smem constant byte address 0x4 - core index']
  #allocation1 [shape = 'u32[144,128]{1,0:T(1,128)}', space=vmem, size = 0x12000, scoped, tag = 'internal scratch']
  %s0 = inlined_call_operand.hbm [shape: f32[4,4], index: 0, kind: input, shape index: {}]
  %s1 = inlined_call_operand.hbm [shape: f32[2,4,256], index: 1, kind: input, shape index: {}]
  %s2 = inlined_call_operand.hbm [shape: f32[2,4,256], index: 2, kind: output, shape index: {}]
  %s3 = sld [smem:[#allocation0]]
  $region26: #{tpu_custom_call.1} parent=0
    _
  %s5 = ssub.s32 1, %s3
  %s6 = scalar_select 0, %s5, %s3
  $region1: #{tpu_custom_call.1} parent=0
    #allocation2 [shape = 'u8[2048]{0}', space=vmem, size = 0x800, scoped, tag = 'input window, operand 0, single buffered']
    #allocation3 [shape = 's32[1]{0}', space=sflag, size = 0x4, scoped, tag = 'scoped memory for tpu_custom_call.1']
    #allocation4 [shape = 's32[1]{0}', space=sflag, size = 0x4, scoped, tag = 'scoped memory for tpu_custom_call.1']
    #allocation5 [shape = 'u8[8192]{0}', space=vmem, size = 0x2000, scoped, tag = 'input window, operand 1, single buffered']
    #allocation6 [shape = 's32[1]{0}', space=sflag, size = 0x4, scoped, tag = 'scoped memory for tpu_custom_call.1']
    #allocation7 [shape = 'u8[8192]{0}', space=vmem, size = 0x2000, scoped, tag = 'output window, operand 0, single buffered']
    %7 = vsyncpa [#allocation3], 0
    %8 = vsyncpa [#allocation6], 0
    %9 = vsyncpa [#allocation4], 0
    // Predicated region
    $region2: #{tpu_custom_call.1} parent=1 // pred_check
      _
    $region3: #{tpu_custom_call.1} parent=1 // pred_check_branch
      %11 = sbr.rel (0) target = $region5
    $region4: #{tpu_custom_call.1} parent=1 // pred_region
      %s13 = ssub.s32 64, 64
      %14 = vsyncadd [#allocation3], %s13
      %s16 = sshll.u32 [#allocation2], 4
      %s17 = int_to_ptr.vmem [resolvable:$true] %s16
      %19 = dma.hbm_to_vmem [thread:$0]  %s0, 64, %s17, [#allocation3]
    $region5: #{tpu_custom_call.1} parent=1 // pred_fallthru
      _
    // Predicated region
    $region6: #{tpu_custom_call.1} parent=1 // pred_check
      _
    $region7: #{tpu_custom_call.1} parent=1 // pred_check_branch
      %21 = sbr.rel (0) target = $region9
    $region8: #{tpu_custom_call.1} parent=1 // pred_region
      %s23 = ssub.s32 256, 256
      %24 = vsyncadd [#allocation6], %s23
      %s25 = sshll.u32 [#allocation5], 4
      %s26 = int_to_ptr.vmem [resolvable:$true] %s25
      %31 = dma.hbm_to_vmem [thread:$0]  %s1, 256, %s26, [#allocation6], 128, 128, 8
    $region9: #{tpu_custom_call.1} parent=1 // pred_fallthru
      _
    // Predicated region
    $region10: #{tpu_custom_call.1} parent=1 // pred_check
      _
    $region11: #{tpu_custom_call.1} parent=1 // pred_check_branch
      %33 = sbr.rel (0) target = $region13
    $region12: #{tpu_custom_call.1} parent=1 // pred_region
      %34 = dma.done [#allocation3], 64
    $region13: #{tpu_custom_call.1} parent=1 // pred_fallthru
      _
    // Predicated region
    $region14: #{tpu_custom_call.1} parent=1 // pred_check
      _
    $region15: #{tpu_custom_call.1} parent=1 // pred_check_branch
      %36 = sbr.rel (0) target = $region17
    $region16: #{tpu_custom_call.1} parent=1 // pred_region
      %37 = dma.done [#allocation6], 256
    $region17: #{tpu_custom_call.1} parent=1 // pred_fallthru
      _
    %v38 = vld [vmem:[#allocation2] sm:$0xf]
    %v39 = vld [vmem:[#allocation5] sm:$0xff]
    %v41 = vcombine.high %v39, %v39
    %vm42 = vcmask 31744
    %v44 = vsel %vm42, %v38, 0
    %vm46 = vcmask 1043456
    %v47 = vsel %vm46, %v39, 0
    %v49 = vsel %vm46, %v41, 0
    %51 = vmatprep.subr.mxu0 %v49
    %52 = vmatpush1.msra.mxu0 %v47
    %53 = vmatprep.subr.mxu0 0.0
    %54 = vmatpush1.msra.mxu0 0.0
    %55 = vmatprep.subr.mxu0 0.0
    %56 = vmatpush1.msra.mxu0 0.0
    %57 = vmatprep.subr.mxu0 0.0
    %58 = vmatpush1.msra.mxu0 0.0
    %59 = vmatprep.subr.mxu0 0.0
    %60 = vmatpush1.msra.mxu0 0.0
    %61 = vmatprep.subr.mxu0 0.0
    %62 = vmatpush1.msra.mxu0 0.0
    %63 = vmatprep.subr.mxu0 0.0
    %64 = vmatpush1.msra.mxu0 0.0
    %65 = vmatprep.subr.mxu0 0.0
    %66 = vmatpush1.msra.mxu0 0.0
    %67 = vmatprep.subr.mxu0 0.0
    %68 = vmatpush1.msra.mxu0 0.0
    %69 = vmatprep.subr.mxu0 0.0
    %70 = vmatpush1.msra.mxu0 0.0
    %71 = vmatprep.subr.mxu0 0.0
    %72 = vmatpush1.msra.mxu0 0.0
    %73 = vmatprep.subr.mxu0 0.0
    %74 = vmatpush1.msra.mxu0 0.0
    %75 = vmatprep.subr.mxu0 0.0
    %76 = vmatpush1.msra.mxu0 0.0
    %77 = vmatprep.subr.mxu0 0.0
    %78 = vmatpush1.msra.mxu0 0.0
    %79 = vmatprep.subr.mxu0 0.0
    %80 = vmatpush1.msra.mxu0 0.0
    %81 = vmatprep.subr.mxu0 0.0
    %82 = vmatpush1.msra.mxu0 0.0
    %83 = vmatprep.subr.mxu0 0.0
    %84 = vmatpush1.msra.mxu0 0.0
    %85 = vmatprep.subr.mxu0 0.0
    %86 = vmatpush1.msra.mxu0 0.0
    %87 = vmatprep.subr.mxu0 0.0
    %88 = vmatpush1.msra.mxu0 0.0
    %89 = vmatprep.subr.mxu0 0.0
    %90 = vmatpush1.msra.mxu0 0.0
    %91 = vmatprep.subr.mxu0 0.0
    %92 = vmatpush1.msra.mxu0 0.0
    %93 = vmatprep.subr.mxu0 0.0
    %94 = vmatpush1.msra.mxu0 0.0
    %95 = vmatprep.subr.mxu0 0.0
    %96 = vmatpush1.msra.mxu0 0.0
    %97 = vmatprep.subr.mxu0 0.0
    %98 = vmatpush1.msra.mxu0 0.0
    %99 = vmatprep.subr.mxu0 0.0
    %100 = vmatpush1.msra.mxu0 0.0
    %101 = vmatprep.subr.mxu0 0.0
    %102 = vmatpush1.msra.mxu0 0.0
    %103 = vmatprep.subr.mxu0 0.0
    %104 = vmatpush1.msra.mxu0 0.0
    %105 = vmatprep.subr.mxu0 0.0
    %106 = vmatpush1.msra.mxu0 0.0
    %107 = vmatprep.subr.mxu0 0.0
    %108 = vmatpush1.msra.mxu0 0.0
    %109 = vmatprep.subr.mxu0 0.0
    %110 = vmatpush1.msra.mxu0 0.0
    %111 = vmatprep.subr.mxu0 0.0
    %112 = vmatpush1.msra.mxu0 0.0
    %113 = vmatprep.subr.mxu0 0.0
    %114 = vmatpush1.msra.mxu0 0.0
    %115 = vmatprep.mubr.f32.mxu0 0.0
    %116 = vmatmul.mubr.f32.gmra.mrb[0].mxu0 %v44
    %v117 = vpop.f32.mrb[0].mxu0
    %v118 = vadd.f32 0.0, %v117
    %v119 = vpop.f32.mrb[0].mxu0
    %v120 = vadd.f32 0.0, %v119
    %121 = vdwg.mxu0
    %v124 = vcombine.low %v118, %v120
    %126 = vst [vmem:[#allocation7] sm:$0xff] %v124
    %s127 = scalar_lea.vmem [#allocation5], 8
    %v128 = vld [vmem:[%s127] sm:$0xff]
    %v130 = vcombine.high %v128, %v128
    %v131 = vsel %vm46, %v128, 0
    %v133 = vsel %vm46, %v130, 0
    %135 = vmatprep.subr.mxu0 %v133
    %136 = vmatpush1.msra.mxu0 %v131
    %137 = vmatprep.subr.mxu0 0.0
    %138 = vmatpush1.msra.mxu0 0.0
    %139 = vmatprep.subr.mxu0 0.0
    %140 = vmatpush1.msra.mxu0 0.0
    %141 = vmatprep.subr.mxu0 0.0
    %142 = vmatpush1.msra.mxu0 0.0
    %143 = vmatprep.subr.mxu0 0.0
    %144 = vmatpush1.msra.mxu0 0.0
    %145 = vmatprep.subr.mxu0 0.0
    %146 = vmatpush1.msra.mxu0 0.0
    %147 = vmatprep.subr.mxu0 0.0
    %148 = vmatpush1.msra.mxu0 0.0
    %149 = vmatprep.subr.mxu0 0.0
    %150 = vmatpush1.msra.mxu0 0.0
    %151 = vmatprep.subr.mxu0 0.0
    %152 = vmatpush1.msra.mxu0 0.0
    %153 = vmatprep.subr.mxu0 0.0
    %154 = vmatpush1.msra.mxu0 0.0
    %155 = vmatprep.subr.mxu0 0.0
    %156 = vmatpush1.msra.mxu0 0.0
    %157 = vmatprep.subr.mxu0 0.0
    %158 = vmatpush1.msra.mxu0 0.0
    %159 = vmatprep.subr.mxu0 0.0
    %160 = vmatpush1.msra.mxu0 0.0
    %161 = vmatprep.subr.mxu0 0.0
    %162 = vmatpush1.msra.mxu0 0.0
    %163 = vmatprep.subr.mxu0 0.0
    %164 = vmatpush1.msra.mxu0 0.0
    %165 = vmatprep.subr.mxu0 0.0
    %166 = vmatpush1.msra.mxu0 0.0
    %167 = vmatprep.subr.mxu0 0.0
    %168 = vmatpush1.msra.mxu0 0.0
    %169 = vmatprep.subr.mxu0 0.0
    %170 = vmatpush1.msra.mxu0 0.0
    %171 = vmatprep.subr.mxu0 0.0
    %172 = vmatpush1.msra.mxu0 0.0
    %173 = vmatprep.subr.mxu0 0.0
    %174 = vmatpush1.msra.mxu0 0.0
    %175 = vmatprep.subr.mxu0 0.0
    %176 = vmatpush1.msra.mxu0 0.0
    %177 = vmatprep.subr.mxu0 0.0
    %178 = vmatpush1.msra.mxu0 0.0
    %179 = vmatprep.subr.mxu0 0.0
    %180 = vmatpush1.msra.mxu0 0.0
    %181 = vmatprep.subr.mxu0 0.0
    %182 = vmatpush1.msra.mxu0 0.0
    %183 = vmatprep.subr.mxu0 0.0
    %184 = vmatpush1.msra.mxu0 0.0
    %185 = vmatprep.subr.mxu0 0.0
    %186 = vmatpush1.msra.mxu0 0.0
    %187 = vmatprep.subr.mxu0 0.0
    %188 = vmatpush1.msra.mxu0 0.0
    %189 = vmatprep.subr.mxu0 0.0
    %190 = vmatpush1.msra.mxu0 0.0
    %191 = vmatprep.subr.mxu0 0.0
    %192 = vmatpush1.msra.mxu0 0.0
    %193 = vmatprep.subr.mxu0 0.0
    %194 = vmatpush1.msra.mxu0 0.0
    %195 = vmatprep.subr.mxu0 0.0
    %196 = vmatpush1.msra.mxu0 0.0
    %197 = vmatprep.subr.mxu0 0.0
    %198 = vmatpush1.msra.mxu0 0.0
    %199 = vmatprep.mubr.f32.mxu0 0.0
    %200 = vmatmul.mubr.f32.gmra.mrb[0].mxu0 %v44
    %v201 = vpop.f32.mrb[0].mxu0
    %v202 = vadd.f32 0.0, %v201
    %v203 = vpop.f32.mrb[0].mxu0
    %v204 = vadd.f32 0.0, %v203
    %205 = vdwg.mxu0
    %v208 = vcombine.low %v202, %v204
    %s210 = scalar_lea.vmem [#allocation7], 8
    %211 = vst [vmem:[%s210] sm:$0xff] %v208
    // Predicated region
    $region18: #{tpu_custom_call.1} parent=1 // pred_check
      _
    $region19: #{tpu_custom_call.1} parent=1 // pred_check_branch
      %213 = sbr.rel (0) target = $region21
    $region20: #{tpu_custom_call.1} parent=1 // pred_region
      %s215 = ssub.s32 256, 256
      %216 = vsyncadd [#allocation4], %s215
      %s217 = sshll.u32 [#allocation7], 4
      %s218 = int_to_ptr.vmem [resolvable:$true] %s217
      %223 = dma.vmem_to_hbm [thread:$0]  %s218, 256, %s2, [#allocation4], 128, 128, 8
    $region21: #{tpu_custom_call.1} parent=1 // pred_fallthru
      _
    // Predicated region
    $region22: #{tpu_custom_call.1} parent=1 // pred_check
      _
    $region23: #{tpu_custom_call.1} parent=1 // pred_check_branch
      %225 = sbr.rel (0) target = $region25
    $region24: #{tpu_custom_call.1} parent=1 // pred_region
      %226 = dma.done [#allocation4], 256
    $region25: #{tpu_custom_call.1} parent=1 // pred_fallthru
      _
    %227 = vsyncpa [#allocation3], 1
    %228 = vsyncpa [#allocation6], 1
    %229 = vsyncpa [#allocation4], 1

</llo_original>
